<compile_context>
chip_gen: v7x
topology: tpu7x:2x2x1
jax: 0.10.0
libtpu: 0.0.40
codegen_flags: <defaults>
</compile_context>

<pallas_src>
import functools
import math

import jax
import jax.numpy as jnp
from jax.experimental import pallas as pl
from jax.experimental.pallas import tpu as pltpu


def _round_up(a, b):
    return -(-a // b) * b


def _wscs_loss_kernel(y_ref, x_ref, wt_ref, loss_ref, *, n_tokens, ragged):
    """Sampled-softmax cross-entropy for one tile of tokens.

    logits[k, t] = sum_d W^T[k, d] * x[t, d]   (classes on sublanes, tokens on lanes)
    loss[t]      = logsumexp_k(logits[:, t]) - logits[y_t, t], 0 for padded lanes.
    """
    # Single MXU matmul per token tile (q.k^T orientation), f32 accumulation.
    scores = jax.lax.dot_general(
        wt_ref[...], x_ref[...],
        dimension_numbers=(((1,), (1,)), ((), ())),
        preferred_element_type=jnp.float32,
    )                                                       # (K, TN) f32
    k_classes, tn = scores.shape

    if ragged:
        # Edge block of x may contain garbage rows (no wrapper-side pad of x).
        # Sanitize those lanes BEFORE exp so inf/NaN cannot propagate.
        lane = jax.lax.broadcasted_iota(jnp.int32, (1, tn), 1)
        valid = (pl.program_id(0) * tn + lane) < n_tokens   # (1, TN) bool
        scores = jnp.where(valid, scores, 0.0)

    # logsumexp over the class (sublane) axis -> lane-dense (1, TN) results.
    mx = jnp.max(scores, axis=0, keepdims=True)
    lse = mx + jnp.log(jnp.sum(jnp.exp(scores - mx), axis=0, keepdims=True))

    y = y_ref[0]                                            # (1, TN) int32, lane-dense
    cls = jax.lax.broadcasted_iota(jnp.int32, scores.shape, 0)
    tgt = jnp.sum(jnp.where(cls == y, scores, 0.0), axis=0, keepdims=True)

    loss = lse - tgt                                        # (1, TN)
    if ragged:
        loss = jnp.where(valid, loss, 0.0)
    loss_ref[0] = loss                                      # lane-dense, unmasked store


def window_sampled_cnn_softmax_loss(x, y, embedding_matrix, M, corr_weight, samples,
                                    *, token_tile=None, compute_dtype=jnp.bfloat16):
    """x: (N, D), y: (N,) int32 column indices in [0, K) (already dict-remapped),
    embedding_matrix: (D, K), M: (D, R), corr_weight: (n_class, R),
    samples: (K,) int32 word ids.  Returns the summed cross-entropy loss (scalar)."""
    # ---- glue in plain JAX (one-time cost): embedding gather + weight fold ----
    corr_t = corr_weight[samples]                          # (K, R)  == self.corr(samples)
    #   x@E + (x@M)@corr_t^T == x @ (E + M@corr_t^T); pass it transposed (K, D)
    #   so the kernel contracts last dims of both operands (tokens stay on lanes).
    w_t = embedding_matrix.T + corr_t @ M.T                # (K, D)

    N, D = x.shape
    K = w_t.shape[0]

    x_c = x.astype(compute_dtype)                          # bf16 halves the dominant HBM stream
    w_c = w_t.astype(compute_dtype)
    itemsize = jnp.dtype(compute_dtype).itemsize
    sub = {4: 8, 2: 16, 1: 32}.get(itemsize, 8)            # dtype-aware sublane granule

    # ---- chip-aware VMEM budget (honest: double buffers, lane padding, dtype) ----
    try:
        vmem_cap = int(getattr(pltpu.get_tpu_info(), "vmem_capacity_bytes", 0)) or (64 << 20)
    except Exception:
        vmem_cap = 64 << 20                                # conservative (v7x per-TC physical)
    budget = min(int(0.70 * vmem_cap), 100 << 20)

    def est_vmem(t):
        t = min(t, N)
        lane = lambda v: _round_up(v, 128)
        return (2 * _round_up(t, sub) * lane(D) * itemsize     # x tile, double-buffered
                + 2 * _round_up(K, sub) * lane(D) * itemsize   # resident folded W^T (2 bufs)
                + 2 * 8 * lane(t) * 4                          # y   (1,1,t) int32, sublane-padded
                + 2 * 8 * lane(t) * 4)                         # loss (1,1,t) f32,  sublane-padded

    # ---- token-tile selection ----
    want = token_tile if token_tile is not None else 1024  # 512-1024 rows ~= 85%+ HBM roofline
    if N <= want:
        # Prefer >= 2 tiles for larger N so both v7x TensorCores get token work.
        tn = N if N < 512 else _round_up(-(-N // 2), sub)
    else:
        tn = _round_up(want, sub)
    while tn > sub and est_vmem(tn) > budget:
        tn = max(sub, _round_up(tn // 2, sub))
    tn = min(tn, N)

    num_tiles = -(-N // tn)
    n_pad = num_tiles * tn
    ragged = (n_pad != N)

    # y is tiny: pad + reshape to lane-dense (num_tiles, 1, tn) blocks.  x is NOT padded.
    y_p = jnp.pad(y.astype(jnp.int32), (0, n_pad - N)).reshape(num_tiles, 1, tn)

    vmem_limit = int(min(max(est_vmem(tn) + (4 << 20), 16 << 20), int(0.9 * vmem_cap)))

    kernel = functools.partial(_wscs_loss_kernel, n_tokens=N, ragged=ragged)

    per_token_loss = pl.pallas_call(
        kernel,
        out_shape=jax.ShapeDtypeStruct((num_tiles, 1, tn), jnp.float32),
        grid_spec=pltpu.PrefetchScalarGridSpec(
            num_scalar_prefetch=0,
            grid=(num_tiles,),
            in_specs=[
                pl.BlockSpec((1, 1, tn), lambda i: (i, 0, 0)),   # y, lane-dense int32
                pl.BlockSpec((tn, D), lambda i: (i, 0)),         # x streamed, natural layout
                # Folded W^T: constant index map keeps it resident (re-DMA skipped after
                # step 0).  pl.Buffered(1) would drop its second buffer; kept at the
                # default to guarantee lowering; the 2x cost is in est_vmem above.
                pl.BlockSpec((K, D), lambda i: (0, 0)),
            ],
            out_specs=pl.BlockSpec((1, 1, tn), lambda i: (i, 0, 0)),  # lane-dense per-token loss
        ),
        compiler_params=pltpu.CompilerParams(
            dimension_semantics=("parallel",),                 # token tiles independent (v7x 2 TCs)
            vmem_limit_bytes=vmem_limit,
        ),
    )(y_p, x_c, w_c)

    return jnp.sum(per_token_loss)


if __name__ == "__main__":
    key = jax.random.PRNGKey(0)

    # Small shapes consistent with the module's forward.
    output_dim = 32   # hidden dim of x
    corr_dim = 16
    n_class = 64
    n_samples = 15
    K = 1 + n_samples  # oov column + sampled columns (softmax width)

    k1, k2, k3, k4, k5, k6, k7 = jax.random.split(key, 7)

    # Deterministic parameter init mirroring __init__.
    stdv = 1.0 / math.sqrt(corr_dim)
    M = jax.random.uniform(k1, (output_dim, corr_dim), jnp.float32, -stdv, stdv)
    corr_weight = jax.random.uniform(k2, (n_class, corr_dim), jnp.float32, -0.25, 0.25)
    oov_column = jax.random.uniform(k3, (output_dim, 1), jnp.float32, -0.25, 0.25)

    # Synthetic stand-in for token_embedder outputs built by update_embedding_matrix().
    sampled_cols = 0.1 * jax.random.normal(k4, (output_dim, n_samples), jnp.float32)
    embedding_matrix = jnp.concatenate([oov_column, sampled_cols], axis=1)  # (D, K)

    samples = jnp.concatenate(
        [jnp.zeros((1,), jnp.int32),
         jax.random.randint(k7, (n_samples,), 1, n_class, jnp.int32)])

    def reference_loss(x, y):
        # Pure-JAX reference: unfolded three-matmul formulation, f32 everywhere.
        scores = x @ embedding_matrix + (x @ M) @ corr_weight[samples].T
        return jnp.sum(jax.nn.logsumexp(scores, axis=-1)
                       - scores[jnp.arange(x.shape[0]), y])

    # --- config A: tiny batch, single tile, f32 compute (tight numerical check) ---
    N = 8
    x = jax.random.normal(k5, (N, output_dim), jnp.float32)
    # TODO(synk): the word->column Python-dict remapping of y in forward() is host-side
    # stateful code; y is supplied directly as column indices in [0, K).
    y = jax.random.randint(k6, (N,), 0, K, jnp.int32)
    loss = window_sampled_cnn_softmax_loss(
        x, y, embedding_matrix, M, corr_weight, samples, compute_dtype=jnp.float32)
    jax.block_until_ready(loss)
    ref = reference_loss(x, y)
    assert jnp.allclose(loss, ref, rtol=5e-4, atol=5e-4), (loss, ref)

    # --- config B: multi-tile grid + ragged last tile, default bf16 operands ---
    N2 = 300
    kx, ky = jax.random.split(jax.random.PRNGKey(1))
    x2 = jax.random.normal(kx, (N2, output_dim), jnp.float32)
    y2 = jax.random.randint(ky, (N2,), 0, K, jnp.int32)
    loss2 = window_sampled_cnn_softmax_loss(
        x2, y2, embedding_matrix, M, corr_weight, samples, token_tile=128)
    jax.block_until_ready(loss2)
    ref2 = reference_loss(x2, y2)
    # bf16 matmul operands reorder/round vs the f32 reference -> looser tolerance.
    assert jnp.allclose(loss2, ref2, rtol=3e-2, atol=0.5), (loss2, ref2)

    print("KERNEL_OK")
</pallas_src>

<mosaic_0001>
module attributes {stable_mosaic.version = 11 : i64} {
  func.func @_wscs_loss_kernel(%arg0: i32, %arg1: memref<1x1x8xi32, #tpu.memory_space<vmem>>, %arg2: memref<8x32xf32, #tpu.memory_space<vmem>>, %arg3: memref<16x32xf32, #tpu.memory_space<vmem>>, %arg4: memref<1x1x8xf32, #tpu.memory_space<vmem>>) attributes {dimension_semantics = [#tpu.dimension_semantics<parallel>], iteration_bounds = array<i64: 1>, scalar_prefetch = 0 : i64, scratch_operands = 0 : i64, tpu.core_type = #tpu.core_type<tc>, window_params = [{transform_indices = @transform_0, window_bounds = array<i64: 1, 1, 8>}, {transform_indices = @transform_1, window_bounds = array<i64: 8, 32>}, {pipeline_mode = #tpu.pipeline_mode<synchronous>, transform_indices = @transform_2, window_bounds = array<i64: 16, 32>}, {transform_indices = @transform_3, window_bounds = array<i64: 1, 1, 8>}]} {
    %c0 = arith.constant 0 : index
    %c0_0 = arith.constant 0 : index
    %0 = vector.load %arg3[%c0, %c0_0] : memref<16x32xf32, #tpu.memory_space<vmem>>, vector<16x32xf32>
    %c0_1 = arith.constant 0 : index
    %c0_2 = arith.constant 0 : index
    %1 = vector.load %arg2[%c0_1, %c0_2] : memref<8x32xf32, #tpu.memory_space<vmem>>, vector<8x32xf32>
    %cst = arith.constant dense<0.000000e+00> : vector<16x8xf32>
    %2 = tpu.matmul %0, %1, %cst {dimension_numbers = #tpu.dot_dimension_numbers<[1], [1], [0], [0], [0, 0, 1, 0], [], []>} : vector<16x32xf32>, vector<8x32xf32>, vector<16x8xf32> -> vector<16x8xf32>
    %cst_3 = arith.constant dense<0xFF800000> : vector<8xf32>
    %3 = vector.multi_reduction <maximumf>, %2, %cst_3 [0] : vector<16x8xf32> to vector<8xf32>
    %4 = vector.shape_cast %3 : vector<8xf32> to vector<1x8xf32>
    %5 = vector.broadcast %4 : vector<1x8xf32> to vector<16x8xf32>
    %6 = arith.subf %2, %5 : vector<16x8xf32>
    %7 = math.exp %6 : vector<16x8xf32>
    %cst_4 = arith.constant dense<0.000000e+00> : vector<8xf32>
    %8 = vector.multi_reduction <add>, %7, %cst_4 [0] : vector<16x8xf32> to vector<8xf32>
    %9 = vector.shape_cast %8 : vector<8xf32> to vector<1x8xf32>
    %10 = math.log %9 : vector<1x8xf32>
    %11 = arith.addf %4, %10 : vector<1x8xf32>
    %c0_5 = arith.constant 0 : index
    %c0_6 = arith.constant 0 : index
    %c0_7 = arith.constant 0 : index
    %12 = vector.load %arg1[%c0_5, %c0_6, %c0_7] : memref<1x1x8xi32, #tpu.memory_space<vmem>>, vector<1x1x8xi32>
    %13 = vector.shape_cast %12 : vector<1x1x8xi32> to vector<1x8xi32>
    %14 = tpu.iota {dimensions = array<i32: 0>} : vector<16x8xi32>
    %15 = vector.broadcast %13 : vector<1x8xi32> to vector<16x8xi32>
    %16 = arith.cmpi eq, %14, %15 : vector<16x8xi32>
    %cst_8 = arith.constant 0.000000e+00 : f32
    %17 = vector.broadcast %cst_8 : f32 to vector<16x8xf32>
    %18 = arith.select %16, %2, %17 : vector<16x8xi1>, vector<16x8xf32>
    %cst_9 = arith.constant dense<0.000000e+00> : vector<8xf32>
    %19 = vector.multi_reduction <add>, %18, %cst_9 [0] : vector<16x8xf32> to vector<8xf32>
    %20 = vector.shape_cast %19 : vector<8xf32> to vector<1x8xf32>
    %21 = arith.subf %11, %20 : vector<1x8xf32>
    %c0_10 = arith.constant 0 : index
    %c0_11 = arith.constant 0 : index
    %c0_12 = arith.constant 0 : index
    %22 = vector.load %arg4[%c0_10, %c0_11, %c0_12] : memref<1x1x8xf32, #tpu.memory_space<vmem>>, vector<1x1x8xf32>
    %23 = vector.shape_cast %22 : vector<1x1x8xf32> to vector<1x8xf32>
    %24 = vector.shape_cast %21 : vector<1x8xf32> to vector<1x1x8xf32>
    tpu.vector_store %arg4[%c0_10, %c0_11, %c0_12], %24 {strides = array<i32>} : memref<1x1x8xf32, #tpu.memory_space<vmem>>, vector<1x1x8xf32>,
    return
  }
  func.func @transform_0(%arg0: i32) -> (i32, i32, i32) {
    %c0_i32 = arith.constant 0 : i32
    %c0_i32_0 = arith.constant 0 : i32
    %c0_i32_1 = arith.constant 0 : i32
    return %arg0, %c0_i32, %c0_i32_0 : i32, i32, i32
  }
  func.func @transform_1(%arg0: i32) -> (i32, i32) {
    %c0_i32 = arith.constant 0 : i32
    %c0_i32_0 = arith.constant 0 : i32
    return %arg0, %c0_i32 : i32, i32
  }
  func.func @transform_2(%arg0: i32) -> (i32, i32) {
    %c0_i32 = arith.constant 0 : i32
    %c0_i32_0 = arith.constant 0 : i32
    %c0_i32_1 = arith.constant 0 : i32
    return %c0_i32, %c0_i32_0 : i32, i32
  }
  func.func @transform_3(%arg0: i32) -> (i32, i32, i32) {
    %c0_i32 = arith.constant 0 : i32
    %c0_i32_0 = arith.constant 0 : i32
    %c0_i32_1 = arith.constant 0 : i32
    return %arg0, %c0_i32, %c0_i32_0 : i32, i32, i32
  }
}

</mosaic_0001>

<llo_original>
// kernel: tpu_custom_call.1
$region0: #{tpu_custom_call.1}
  #allocation0 [shape = 'u32[]', space=smem, size = 0x4, offset = 0x4, fixed_abs, tag = 'smem constant byte address 0x4 - core index']
  #allocation1 [shape = 'u32[144,128]{1,0:T(1,128)}', space=vmem, size = 0x12000, scoped, tag = 'internal scratch']
  %s0 = inlined_call_operand.hbm [shape: s32[1,1,8], index: 0, kind: input, shape index: {}]
  %s1 = inlined_call_operand.hbm [shape: f32[8,32], index: 1, kind: input, shape index: {}]
  %s2 = inlined_call_operand.hbm [shape: f32[16,32], index: 2, kind: input, shape index: {}]
  %s3 = inlined_call_operand.hbm [shape: f32[1,1,8], index: 3, kind: output, shape index: {}]
  %s4 = sld [smem:[#allocation0]]
  $region34: #{tpu_custom_call.1} parent=0
    _
  %s6 = ssub.s32 1, %s4
  %s7 = scalar_select 0, %s6, %s4
  $region1: #{tpu_custom_call.1} parent=0
    #allocation2 [shape = 'u8[512]{0}', space=vmem, size = 0x400, scoped, tag = 'input window, operand 0, single buffered']
    #allocation3 [shape = 's32[1]{0}', space=sflag, size = 0x4, scoped, tag = 'scoped memory for tpu_custom_call.1']
    #allocation4 [shape = 's32[1]{0}', space=sflag, size = 0x4, scoped, tag = 'scoped memory for tpu_custom_call.1']
    #allocation5 [shape = 'u8[4096]{0}', space=vmem, size = 0x1000, scoped, tag = 'input window, operand 1, single buffered']
    #allocation6 [shape = 's32[1]{0}', space=sflag, size = 0x4, scoped, tag = 'scoped memory for tpu_custom_call.1']
    #allocation7 [shape = 'u8[8192]{0}', space=vmem, size = 0x2000, scoped, tag = 'input window, operand 2, single buffered']
    #allocation8 [shape = 'u8[512]{0}', space=vmem, size = 0x400, scoped, tag = 'output window, operand 0, single buffered']
    %8 = vsyncpa [#allocation3], 0
    %9 = vsyncpa [#allocation6], 0
    %10 = vsyncpa [#allocation4], 0
    // Predicated region
    $region2: #{tpu_custom_call.1} parent=1 // pred_check
      _
    $region3: #{tpu_custom_call.1} parent=1 // pred_check_branch
      %12 = sbr.rel (0) target = $region5
    $region4: #{tpu_custom_call.1} parent=1 // pred_region
      %s14 = ssub.s32 16, 16
      %15 = vsyncadd [#allocation3], %s14
      %s17 = sshll.u32 [#allocation2], 4
      %s18 = int_to_ptr.vmem [resolvable:$true] %s17
      %20 = dma.hbm_to_vmem [thread:$0]  %s0, 16, %s18, [#allocation3]
    $region5: #{tpu_custom_call.1} parent=1 // pred_fallthru
      _
    // Predicated region
    $region6: #{tpu_custom_call.1} parent=1 // pred_check
      _
    $region7: #{tpu_custom_call.1} parent=1 // pred_check_branch
      %22 = sbr.rel (0) target = $region9
    $region8: #{tpu_custom_call.1} parent=1 // pred_region
      %s24 = ssub.s32 128, 128
      %25 = vsyncadd [#allocation6], %s24
      %s27 = sshll.u32 [#allocation5], 4
      %s28 = int_to_ptr.vmem [resolvable:$true] %s27
      %30 = dma.hbm_to_vmem [thread:$0]  %s1, 128, %s28, [#allocation6]
    $region9: #{tpu_custom_call.1} parent=1 // pred_fallthru
      _
    // Predicated region
    $region10: #{tpu_custom_call.1} parent=1 // pred_check
      _
    $region11: #{tpu_custom_call.1} parent=1 // pred_check_branch
      %32 = sbr.rel (0) target = $region13
    $region12: #{tpu_custom_call.1} parent=1 // pred_region
      %s34 = ssub.s32 256, 256
      %35 = vsyncadd [#allocation6], %s34
      %s36 = sshll.u32 [#allocation7], 4
      %s37 = int_to_ptr.vmem [resolvable:$true] %s36
      %42 = dma.hbm_to_vmem [thread:$0]  %s2, 256, %s37, [#allocation6], 128, 128, 8
    $region13: #{tpu_custom_call.1} parent=1 // pred_fallthru
      _
    // Predicated region
    $region14: #{tpu_custom_call.1} parent=1 // pred_check
      _
    $region15: #{tpu_custom_call.1} parent=1 // pred_check_branch
      %44 = sbr.rel (0) target = $region17
    $region16: #{tpu_custom_call.1} parent=1 // pred_region
      %45 = dma.done [#allocation3], 16
    $region17: #{tpu_custom_call.1} parent=1 // pred_fallthru
      _
    // Predicated region
    $region18: #{tpu_custom_call.1} parent=1 // pred_check
      _
    $region19: #{tpu_custom_call.1} parent=1 // pred_check_branch
      %47 = sbr.rel (0) target = $region21
    $region20: #{tpu_custom_call.1} parent=1 // pred_region
      %48 = dma.done [#allocation6], 128
    $region21: #{tpu_custom_call.1} parent=1 // pred_fallthru
      _
    // Predicated region
    $region22: #{tpu_custom_call.1} parent=1 // pred_check
      _
    $region23: #{tpu_custom_call.1} parent=1 // pred_check_branch
      %50 = sbr.rel (0) target = $region25
    $region24: #{tpu_custom_call.1} parent=1 // pred_region
      %51 = dma.done [#allocation6], 256
    $region25: #{tpu_custom_call.1} parent=1 // pred_fallthru
      _
    %v52 = vld [vmem:[#allocation7] sm:$0xff]
    %v53 = vld [vmem:[#allocation7 + $0x8] sm:$0xff]
    %v54 = vld [vmem:[#allocation5] sm:$0xff]
    %vm55 = vcmask 261120
    %v57 = vsel %vm55, %v52, 0
    %v60 = vsel %vm55, %v53, 0
    %v63 = vsel %vm55, %v54, 0
    %65 = vmatprep.subr.mxu0 0.0
    %66 = vmatpush1.xpose.msra.mxu0 %v63
    %67 = vmatprep.subr.mxu0 0.0
    %68 = vmatpush1.xpose.msra.mxu0 0.0
    %69 = vmatprep.subr.mxu0 0.0
    %70 = vmatpush1.xpose.msra.mxu0 0.0
    %71 = vmatprep.subr.mxu0 0.0
    %72 = vmatpush1.xpose.msra.mxu0 0.0
    %73 = vmatprep.subr.mxu0 0.0
    %74 = vmatpush1.xpose.msra.mxu0 0.0
    %75 = vmatprep.subr.mxu0 0.0
    %76 = vmatpush1.xpose.msra.mxu0 0.0
    %77 = vmatprep.subr.mxu0 0.0
    %78 = vmatpush1.xpose.msra.mxu0 0.0
    %79 = vmatprep.subr.mxu0 0.0
    %80 = vmatpush1.xpose.msra.mxu0 0.0
    %81 = vmatprep.subr.mxu0 0.0
    %82 = vmatpush1.xpose.msra.mxu0 0.0
    %83 = vmatprep.subr.mxu0 0.0
    %84 = vmatpush1.xpose.msra.mxu0 0.0
    %85 = vmatprep.subr.mxu0 0.0
    %86 = vmatpush1.xpose.msra.mxu0 0.0
    %87 = vmatprep.subr.mxu0 0.0
    %88 = vmatpush1.xpose.msra.mxu0 0.0
    %89 = vmatprep.subr.mxu0 0.0
    %90 = vmatpush1.xpose.msra.mxu0 0.0
    %91 = vmatprep.subr.mxu0 0.0
    %92 = vmatpush1.xpose.msra.mxu0 0.0
    %93 = vmatprep.subr.mxu0 0.0
    %94 = vmatpush1.xpose.msra.mxu0 0.0
    %95 = vmatprep.subr.mxu0 0.0
    %96 = vmatpush1.xpose.msra.mxu0 0.0
    %97 = vmatprep.subr.mxu0 0.0
    %98 = vmatpush1.xpose.msra.mxu0 0.0
    %99 = vmatprep.subr.mxu0 0.0
    %100 = vmatpush1.xpose.msra.mxu0 0.0
    %101 = vmatprep.subr.mxu0 0.0
    %102 = vmatpush1.xpose.msra.mxu0 0.0
    %103 = vmatprep.subr.mxu0 0.0
    %104 = vmatpush1.xpose.msra.mxu0 0.0
    %105 = vmatprep.subr.mxu0 0.0
    %106 = vmatpush1.xpose.msra.mxu0 0.0
    %107 = vmatprep.subr.mxu0 0.0
    %108 = vmatpush1.xpose.msra.mxu0 0.0
    %109 = vmatprep.subr.mxu0 0.0
    %110 = vmatpush1.xpose.msra.mxu0 0.0
    %111 = vmatprep.subr.mxu0 0.0
    %112 = vmatpush1.xpose.msra.mxu0 0.0
    %113 = vmatprep.subr.mxu0 0.0
    %114 = vmatpush1.xpose.msra.mxu0 0.0
    %115 = vmatprep.subr.mxu0 0.0
    %116 = vmatpush1.xpose.msra.mxu0 0.0
    %117 = vmatprep.subr.mxu0 0.0
    %118 = vmatpush1.xpose.msra.mxu0 0.0
    %119 = vmatprep.subr.mxu0 0.0
    %120 = vmatpush1.xpose.msra.mxu0 0.0
    %121 = vmatprep.subr.mxu0 0.0
    %122 = vmatpush1.xpose.msra.mxu0 0.0
    %123 = vmatprep.subr.mxu0 0.0
    %124 = vmatpush1.xpose.msra.mxu0 0.0
    %125 = vmatprep.subr.mxu0 0.0
    %126 = vmatpush1.xpose.msra.mxu0 0.0
    %127 = vmatprep.subr.mxu0 0.0
    %128 = vmatpush1.xpose.msra.mxu0 0.0
    %129 = vmatprep.mubr.f32.mxu0 0.0
    %130 = vmatmul.mubr.f32.gmra.mrb[0].mxu0 %v57
    %v131 = vpop.f32.mrb[0].mxu0
    %v132 = vadd.f32 0.0, %v131
    %v133 = vpop.f32.mrb[0].mxu0
    %134 = vmatprep.mubr.f32.mxu0 0.0
    %135 = vmatmul.mubr.f32.gmra.mrb[0].mxu0 %v60
    %v136 = vpop.f32.mrb[0].mxu0
    %v137 = vadd.f32 0.0, %v136
    %v138 = vpop.f32.mrb[0].mxu0
    %139 = vdwg.mxu0
    %vm140 = vcmask 64512
    %v141 = vsel %vm140, %v132, -inf
    %v142 = vsel %vm140, %v137, -inf
    %v143 = vmax.f32 %v141, %v142
    %v144 = vrot.slane %v143, 4
    %v145 = vmax.f32 %v143, %v144
    %v146 = vrot.slane %v145, 2
    %v147 = vmax.f32 %v145, %v146
    %v148 = vrot.slane %v147, 1
    %v149 = vmax.f32 %v147, %v148
    %v150 = vsub.f32 %v132, %v149
    %v151 = vsub.f32 %v137, %v149
    %v152 = vmul.f32 %v150, 1.442695
    %v153 = vpow.pop %v152
    %v154 = vmul.f32 %v151, 1.442695
    %v155 = vpow.pop %v154
    %v156 = vsel %vm140, %v153, 0.0
    %v157 = vsel %vm140, %v155, 0.0
    %v158 = vadd.f32 %v156, %v157
    %v159 = vrot.slane %v158, 4
    %v160 = vadd.f32 %v158, %v159
    %v161 = vrot.slane %v160, 2
    %v162 = vadd.f32 %v160, %v161
    %v163 = vrot.slane %v162, 1
    %v164 = vadd.f32 %v162, %v163
    %v165 = vlog2.pop %v164
    %v166 = vmul.f32 %v165, 0.6931472
    %v167 = vadd.f32 %v149, %v166
    %v168 = vld [vmem:[#allocation2] sm:$0x1]
    %v169 = vlaneseq
    %v170 = vshrl.u32 %v169, 7
    %v171 = vadd.s32 %v170, 8
    %v172 = vlaneseq
    %v173 = vshrl.u32 %v172, 7
    %v174 = vsub.s32 0, %v173
    %v175 = vrot.slane %v168, %v174
    %vm176 = vcmp.eq.s32.totalorder %v170, %v175
    %vm177 = vcmp.eq.s32.totalorder %v171, %v175
    %v178 = vsel %vm176, %v132, 0.0
    %v179 = vsel %vm177, %v137, 0.0
    %v180 = vsel %vm140, %v178, 0.0
    %v181 = vsel %vm140, %v179, 0.0
    %v182 = vadd.f32 %v180, %v181
    %v183 = vrot.slane %v182, 4
    %v184 = vadd.f32 %v182, %v183
    %v185 = vrot.slane %v184, 2
    %v186 = vadd.f32 %v184, %v185
    %v187 = vrot.slane %v186, 1
    %v188 = vadd.f32 %v186, %v187
    %v189 = vsub.f32 %v167, %v188
    %vm190 = vcmask 57344
    %191 = vst.msk [vmem:[#allocation8] sm:$0x1] %vm190, %v189
    // Predicated region
    $region26: #{tpu_custom_call.1} parent=1 // pred_check
      _
    $region27: #{tpu_custom_call.1} parent=1 // pred_check_branch
      %193 = sbr.rel (0) target = $region29
    $region28: #{tpu_custom_call.1} parent=1 // pred_region
      %s195 = ssub.s32 16, 16
      %196 = vsyncadd [#allocation4], %s195
      %s198 = sshll.u32 [#allocation8], 4
      %s199 = int_to_ptr.vmem [resolvable:$true] %s198
      %201 = dma.vmem_to_hbm [thread:$0]  %s199, 16, %s3, [#allocation4]
    $region29: #{tpu_custom_call.1} parent=1 // pred_fallthru
      _
    // Predicated region
    $region30: #{tpu_custom_call.1} parent=1 // pred_check
      _
    $region31: #{tpu_custom_call.1} parent=1 // pred_check_branch
      %203 = sbr.rel (0) target = $region33
    $region32: #{tpu_custom_call.1} parent=1 // pred_region
      %204 = dma.done [#allocation4], 16
    $region33: #{tpu_custom_call.1} parent=1 // pred_fallthru
      _
    %205 = vsyncpa [#allocation3], 1
    %206 = vsyncpa [#allocation6], 1
    %207 = vsyncpa [#allocation4], 1

</llo_original>
